<compile_context>
chip_gen: v7x
topology: tpu7x:2x2x1
jax: 0.10.0
libtpu: 0.0.40
codegen_flags: <defaults>
</compile_context>

<pallas_src>
import functools
import math

import jax
import jax.numpy as jnp
from jax.experimental import pallas as pl
from jax.experimental.pallas import tpu as pltpu


def _fused_mlp_kernel(x_ref, p_ref, o_ref, *, dims, pad):
    """One batch tile of the whole MLP.

    x_ref: (tb, finp) f32
    p_ref: (L, pad+1, pad) f32 packed slab; rows [:fin_l] of layer l hold W_l^T,
           row `pad` holds the bias, everything else is zero.
    o_ref: (tb, pad) f32; only the first dims[-1] lanes are meaningful.
    """
    num_layers = len(dims) - 1
    finp = dims[0]
    x = x_ref[...]  # (tb, finp) f32

    # --- Layer 0: tiny contraction dim (finp=3) -> VPU FMA chain.
    # Bias initializes the accumulator; zero-padded weight columns keep the
    # padded lanes at exactly 0 (tanh(0) == 0), so padding stays inert.
    h = p_ref[0, pad:pad + 1, :]                       # (1, pad) bias
    for j in range(finp):                              # static unroll
        h = h + x[:, j:j + 1] * p_ref[0, j:j + 1, :]   # (tb,1)*(1,pad)
    h = jnp.tanh(h)

    # --- Hidden layers: (tb, pad) x (pad, pad) f32 matmuls on the MXU.
    for layer in range(1, num_layers - 1):
        h = jnp.tanh(
            p_ref[layer, pad:pad + 1, :]
            + jnp.dot(h, p_ref[layer, :pad, :],
                      preferred_element_type=jnp.float32))

    # --- Output layer: no activation.
    last = num_layers - 1
    o_ref[...] = (
        p_ref[last, pad:pad + 1, :]
        + jnp.dot(h, p_ref[last, :pad, :], preferred_element_type=jnp.float32)
    ).astype(o_ref.dtype)


def mymodel_forward(x, packed_params, dims, *, batch_tile=128):
    """Fused forward pass: one pallas_call, grid over batch tiles.

    x:             (B, finp) f32
    packed_params: (L, pad+1, pad) f32 slab from `pack_params`
    dims:          [finp, *nnodes, fout]
    """
    B, finp = x.shape
    num_layers, pad_p1, pad = packed_params.shape
    fout = dims[-1]

    tb = min(batch_tile, B)
    assert B % tb == 0, "batch must be divisible by the batch tile"
    grid = (B // tb,)

    kernel = functools.partial(_fused_mlp_kernel, dims=tuple(dims), pad=pad)

    out_padded = pl.pallas_call(
        kernel,
        out_shape=jax.ShapeDtypeStruct((B, pad), jnp.float32),
        grid=grid,
        in_specs=[
            pl.BlockSpec((tb, finp), lambda i: (i, 0)),          # batch tile of x
            pl.BlockSpec((num_layers, pad_p1, pad),              # whole param slab,
                         lambda i: (0, 0, 0)),                   # VMEM-resident
        ],
        out_specs=pl.BlockSpec((tb, pad), lambda i: (i, 0)),
        compiler_params=pltpu.CompilerParams(
            dimension_semantics=("parallel",)),                  # shard tiles across TCs
    )(x, packed_params)

    return out_padded[:, :fout]


def init_mlp_params(key, finp, fout, nnodes):
    """Deterministic init mirroring nn.Linear defaults.

    Returns (params, dims) with params = list of (w, b) in PyTorch layout:
    w: (fan_out, fan_in), b: (fan_out,).
    """
    dims = [finp] + list(nnodes) + [fout]
    params = []
    for i in range(len(dims) - 1):
        fan_in, fan_out = dims[i], dims[i + 1]
        key, kw, kb = jax.random.split(key, 3)
        bound = 1.0 / math.sqrt(fan_in)
        w = jax.random.uniform(kw, (fan_out, fan_in), jnp.float32, -bound, bound)
        b = jax.random.uniform(kb, (fan_out,), jnp.float32, -bound, bound)
        params.append((w, b))
    return params, dims


def pack_params(params, dims):
    """Pack all layers into ONE zero-padded f32 slab (built once at init).

    slab[l, :fin_l, :fout_l] = W_l^T, slab[l, pad, :fout_l] = b_l, rest zeros.
    """
    num_layers = len(dims) - 1
    pad = max(dims)
    slab = jnp.zeros((num_layers, pad + 1, pad), jnp.float32)
    for l, (w, b) in enumerate(params):
        fan_out, fan_in = w.shape
        slab = slab.at[l, :fan_in, :fan_out].set(w.T)
        slab = slab.at[l, pad, :fan_out].set(b)
    return slab


def reference_forward(x, params):
    h = x
    for (w, b) in params[:-1]:
        h = jnp.tanh(h @ w.T + b)
    w, b = params[-1]
    return h @ w.T + b


if __name__ == "__main__":
    # Lorenz-style MLP: 3 inputs, 3 outputs, two hidden layers of 32 nodes.
    finp, fout = 3, 3
    nnodes = [32, 32]
    batch = 256  # amortizes the launch; grid of two 128-row tiles

    key = jax.random.PRNGKey(0)
    key, kx = jax.random.split(key)
    x = jax.random.normal(kx, (batch, finp), jnp.float32)

    params, dims = init_mlp_params(key, finp, fout, nnodes)
    packed = pack_params(params, dims)

    out = mymodel_forward(x, packed, dims)
    out = jax.block_until_ready(out)

    ref = reference_forward(x, params)
    assert out.shape == (batch, fout)
    assert jnp.allclose(out, ref, atol=1e-5, rtol=1e-5), "mismatch vs reference"

    print("KERNEL_OK")
</pallas_src>

<mosaic_0001>
module attributes {stable_mosaic.version = 11 : i64} {
  func.func @_fused_mlp_kernel(%arg0: i32, %arg1: memref<128x3xf32, #tpu.memory_space<vmem>>, %arg2: memref<3x33x32xf32, #tpu.memory_space<vmem>>, %arg3: memref<128x32xf32, #tpu.memory_space<vmem>>) attributes {dimension_semantics = [#tpu.dimension_semantics<parallel>], iteration_bounds = array<i64: 2>, scalar_prefetch = 0 : i64, scratch_operands = 0 : i64, tpu.core_type = #tpu.core_type<tc>, window_params = [{transform_indices = @transform_0, window_bounds = array<i64: 128, 3>}, {pipeline_mode = #tpu.pipeline_mode<synchronous>, transform_indices = @transform_1, window_bounds = array<i64: 3, 33, 32>}, {transform_indices = @transform_2, window_bounds = array<i64: 128, 32>}]} {
    %c0 = arith.constant 0 : index
    %c0_0 = arith.constant 0 : index
    %0 = vector.load %arg1[%c0, %c0_0] : memref<128x3xf32, #tpu.memory_space<vmem>>, vector<128x3xf32>
    %c0_1 = arith.constant 0 : index
    %c32 = arith.constant 32 : index
    %c0_2 = arith.constant 0 : index
    %1 = vector.load %arg2[%c0_1, %c32, %c0_2] : memref<3x33x32xf32, #tpu.memory_space<vmem>>, vector<1x1x32xf32>
    %2 = vector.shape_cast %1 : vector<1x1x32xf32> to vector<1x32xf32>
    %3 = vector.extract_strided_slice %0 {offsets = [0, 0], sizes = [128, 1], strides = [1, 1]} : vector<128x3xf32> to vector<128x1xf32>
    %c0_3 = arith.constant 0 : index
    %c0_4 = arith.constant 0 : index
    %c0_5 = arith.constant 0 : index
    %4 = vector.load %arg2[%c0_3, %c0_4, %c0_5] : memref<3x33x32xf32, #tpu.memory_space<vmem>>, vector<1x1x32xf32>
    %5 = vector.shape_cast %4 : vector<1x1x32xf32> to vector<1x32xf32>
    %6 = vector.broadcast %3 : vector<128x1xf32> to vector<128x32xf32>
    %7 = vector.broadcast %5 : vector<1x32xf32> to vector<128x32xf32>
    %8 = arith.mulf %6, %7 : vector<128x32xf32>
    %9 = vector.broadcast %2 : vector<1x32xf32> to vector<128x32xf32>
    %10 = arith.addf %9, %8 : vector<128x32xf32>
    %11 = vector.extract_strided_slice %0 {offsets = [0, 1], sizes = [128, 1], strides = [1, 1]} : vector<128x3xf32> to vector<128x1xf32>
    %c0_6 = arith.constant 0 : index
    %c1 = arith.constant 1 : index
    %c0_7 = arith.constant 0 : index
    %12 = vector.load %arg2[%c0_6, %c1, %c0_7] : memref<3x33x32xf32, #tpu.memory_space<vmem>>, vector<1x1x32xf32>
    %13 = vector.shape_cast %12 : vector<1x1x32xf32> to vector<1x32xf32>
    %14 = vector.broadcast %11 : vector<128x1xf32> to vector<128x32xf32>
    %15 = vector.broadcast %13 : vector<1x32xf32> to vector<128x32xf32>
    %16 = arith.mulf %14, %15 : vector<128x32xf32>
    %17 = arith.addf %10, %16 : vector<128x32xf32>
    %18 = vector.extract_strided_slice %0 {offsets = [0, 2], sizes = [128, 1], strides = [1, 1]} : vector<128x3xf32> to vector<128x1xf32>
    %c0_8 = arith.constant 0 : index
    %c2 = arith.constant 2 : index
    %c0_9 = arith.constant 0 : index
    %19 = vector.load %arg2[%c0_8, %c2, %c0_9] : memref<3x33x32xf32, #tpu.memory_space<vmem>>, vector<1x1x32xf32>
    %20 = vector.shape_cast %19 : vector<1x1x32xf32> to vector<1x32xf32>
    %21 = vector.broadcast %18 : vector<128x1xf32> to vector<128x32xf32>
    %22 = vector.broadcast %20 : vector<1x32xf32> to vector<128x32xf32>
    %23 = arith.mulf %21, %22 : vector<128x32xf32>
    %24 = arith.addf %17, %23 : vector<128x32xf32>
    %25 = math.tanh %24 : vector<128x32xf32>
    %c1_10 = arith.constant 1 : index
    %c32_11 = arith.constant 32 : index
    %c0_12 = arith.constant 0 : index
    %26 = vector.load %arg2[%c1_10, %c32_11, %c0_12] : memref<3x33x32xf32, #tpu.memory_space<vmem>>, vector<1x1x32xf32>
    %27 = vector.shape_cast %26 : vector<1x1x32xf32> to vector<1x32xf32>
    %c1_13 = arith.constant 1 : index
    %c0_14 = arith.constant 0 : index
    %c0_15 = arith.constant 0 : index
    %28 = vector.load %arg2[%c1_13, %c0_14, %c0_15] : memref<3x33x32xf32, #tpu.memory_space<vmem>>, vector<1x32x32xf32>
    %29 = vector.shape_cast %28 : vector<1x32x32xf32> to vector<32x32xf32>
    %cst = arith.constant dense<0.000000e+00> : vector<128x32xf32>
    %30 = tpu.matmul %25, %29, %cst {dimension_numbers = #tpu.dot_dimension_numbers<[1], [0], [0], [1], [0, 0, 1, 1], [], []>} : vector<128x32xf32>, vector<32x32xf32>, vector<128x32xf32> -> vector<128x32xf32>
    %31 = vector.broadcast %27 : vector<1x32xf32> to vector<128x32xf32>
    %32 = arith.addf %31, %30 : vector<128x32xf32>
    %33 = math.tanh %32 : vector<128x32xf32>
    %c2_16 = arith.constant 2 : index
    %c32_17 = arith.constant 32 : index
    %c0_18 = arith.constant 0 : index
    %34 = vector.load %arg2[%c2_16, %c32_17, %c0_18] : memref<3x33x32xf32, #tpu.memory_space<vmem>>, vector<1x1x32xf32>
    %35 = vector.shape_cast %34 : vector<1x1x32xf32> to vector<1x32xf32>
    %c2_19 = arith.constant 2 : index
    %c0_20 = arith.constant 0 : index
    %c0_21 = arith.constant 0 : index
    %36 = vector.load %arg2[%c2_19, %c0_20, %c0_21] : memref<3x33x32xf32, #tpu.memory_space<vmem>>, vector<1x32x32xf32>
    %37 = vector.shape_cast %36 : vector<1x32x32xf32> to vector<32x32xf32>
    %cst_22 = arith.constant dense<0.000000e+00> : vector<128x32xf32>
    %38 = tpu.matmul %33, %37, %cst_22 {dimension_numbers = #tpu.dot_dimension_numbers<[1], [0], [0], [1], [0, 0, 1, 1], [], []>} : vector<128x32xf32>, vector<32x32xf32>, vector<128x32xf32> -> vector<128x32xf32>
    %39 = vector.broadcast %35 : vector<1x32xf32> to vector<128x32xf32>
    %40 = arith.addf %39, %38 : vector<128x32xf32>
    %c0_23 = arith.constant 0 : index
    %c0_24 = arith.constant 0 : index
    %41 = vector.load %arg3[%c0_23, %c0_24] : memref<128x32xf32, #tpu.memory_space<vmem>>, vector<128x32xf32>
    tpu.vector_store %arg3[%c0_23, %c0_24], %40 {strides = array<i32>} : memref<128x32xf32, #tpu.memory_space<vmem>>, vector<128x32xf32>,
    return
  }
  func.func @transform_0(%arg0: i32) -> (i32, i32) {
    %c0_i32 = arith.constant 0 : i32
    %c0_i32_0 = arith.constant 0 : i32
    return %arg0, %c0_i32 : i32, i32
  }
  func.func @transform_1(%arg0: i32) -> (i32, i32, i32) {
    %c0_i32 = arith.constant 0 : i32
    %c0_i32_0 = arith.constant 0 : i32
    %c0_i32_1 = arith.constant 0 : i32
    %c0_i32_2 = arith.constant 0 : i32
    return %c0_i32, %c0_i32_0, %c0_i32_1 : i32, i32, i32
  }
  func.func @transform_2(%arg0: i32) -> (i32, i32) {
    %c0_i32 = arith.constant 0 : i32
    %c0_i32_0 = arith.constant 0 : i32
    return %arg0, %c0_i32 : i32, i32
  }
}

</mosaic_0001>

<llo_original>
// kernel: tpu_custom_call.1
$region0: #{tpu_custom_call.1}
  #allocation0 [shape = 'u32[]', space=smem, size = 0x4, offset = 0x4, fixed_abs, tag = 'smem constant byte address 0x4 - core index']
  #allocation1 [shape = 'u32[144,128]{1,0:T(1,128)}', space=vmem, size = 0x12000, scoped, tag = 'internal scratch']
  %s0 = inlined_call_operand.vmem [shape: f32[256,3], index: 0, kind: input, shape index: {}]
  %s1 = inlined_call_operand.vmem [shape: f32[3,33,32], index: 1, kind: input, shape index: {}]
  %s2 = inlined_call_operand.vmem [shape: f32[256,32], index: 2, kind: output, shape index: {}]
  %s3 = sld [smem:[#allocation0]]
  $region41: #{tpu_custom_call.1} parent=0
    _
  %s5 = ssub.s32 1, %s3
  %s6 = scalar_select 0, %s5, %s3
  loop: start=0, step=1, limit=4
  $region2: #{tpu_custom_call.1} parent=0 // loop_pre_header
    _
  $region3: #{tpu_custom_call.1} parent=0 // loop_header
    %s8 = sphi 0, %s12
    %p9 = scmp.ge.s32.totalorder %s8, 4
    %s18 = sphi 0, %s20
    %s21 = sphi 0, %s18
    %s22 = sphi 0, %s21
    %s38 = sphi 0, %s22
    %s42 = sphi 0, %s42
    %s44 = sphi 0, %s42
    %s45 = sphi 0, %s44
    %s59 = sphi 0, %s45
    %s65 = sphi 0, %s67
    %s68 = sphi 0, %s65
    %s69 = sphi 0, %s68
    %s85 = sphi 0, %s69
  $region4: #{tpu_custom_call.1} parent=0 // loop_header_branch
    %11 = sbr.rel (%p9) target = $region8
  $region5: #{tpu_custom_call.1} parent=0 // loop_body
    %s13 = ssub.s32 %s8, 1
    %s14 = ssub.s32 %s8, 2
    %s15 = sadd.s32 %s8, 1
    %s16 = ssub.s32 %s8, %s15
    %p17 = scmp.eq.s32.totalorder %s16, 0
    %s19 = sadd.s32 %s18, 1
    %s20 = scalar_select %p17, %s18, %s19
    %p23 = pneg %p17
    %p24 = scmp.eq.s32.totalorder %s8, 1
    %p25 = por %p23, %p24
    %p26 = scmp.ne.s32.totalorder %s18, %s21
    %p27 = scmp.eq.s32.totalorder %s8, 0
    %p28 = por %p26, %p27
    %p29 = scmp.ne.s32.totalorder %s18, %s21
    %p30 = scmp.eq.s32.totalorder %s13, 1
    %p31 = por %p29, %p30
    %p32 = scmp.ne.s32.totalorder %s21, %s22
    %p33 = scmp.eq.s32.totalorder %s13, 0
    %p34 = por %p32, %p33
    %p35 = scmp.ne.s32.totalorder %s21, %s22
    %p36 = scmp.eq.s32.totalorder %s14, 1
    %p37 = por %p35, %p36
    %p39 = scmp.ne.s32.totalorder %s22, %s38
    %p40 = scmp.eq.s32.totalorder %s14, 0
    %p41 = por %p39, %p40
    %s43 = sadd.s32 %s42, 1
    %p46 = scmp.eq.s32.totalorder %s8, 1
    %p47 = scmp.ne.s32.totalorder %s42, %s44
    %p48 = scmp.eq.s32.totalorder %s8, 0
    %p49 = por %p47, %p48
    %p50 = scmp.ne.s32.totalorder %s42, %s44
    %p51 = scmp.eq.s32.totalorder %s13, 1
    %p52 = por %p50, %p51
    %p53 = scmp.ne.s32.totalorder %s44, %s45
    %p54 = scmp.eq.s32.totalorder %s13, 0
    %p55 = por %p53, %p54
    %p56 = scmp.ne.s32.totalorder %s44, %s45
    %p57 = scmp.eq.s32.totalorder %s14, 1
    %p58 = por %p56, %p57
    %p60 = scmp.ne.s32.totalorder %s45, %s59
    %p61 = scmp.eq.s32.totalorder %s14, 0
    %p62 = por %p60, %p61
    %s63 = ssub.s32 %s8, %s15
    %p64 = scmp.eq.s32.totalorder %s63, 0
    %s66 = sadd.s32 %s65, 1
    %s67 = scalar_select %p64, %s65, %s66
    %p70 = pneg %p64
    %p71 = scmp.eq.s32.totalorder %s8, 1
    %p72 = por %p70, %p71
    %p73 = scmp.ne.s32.totalorder %s65, %s68
    %p74 = scmp.eq.s32.totalorder %s8, 0
    %p75 = por %p73, %p74
    %p76 = scmp.ne.s32.totalorder %s65, %s68
    %p77 = scmp.eq.s32.totalorder %s13, 1
    %p78 = por %p76, %p77
    %p79 = scmp.ne.s32.totalorder %s68, %s69
    %p80 = scmp.eq.s32.totalorder %s13, 0
    %p81 = por %p79, %p80
    %p82 = scmp.ne.s32.totalorder %s68, %s69
    %p83 = scmp.eq.s32.totalorder %s14, 1
    %p84 = por %p82, %p83
    %p86 = scmp.ne.s32.totalorder %s69, %s85
    %p87 = scmp.eq.s32.totalorder %s14, 0
    %p88 = por %p86, %p87
    %p89 = scmp.le.s32.totalorder 1, %s8
    %p90 = scmp.lt.s32.totalorder %s8, 3
    %p91 = pnand %p89, %p90
    %p92 = pneg %p91
    // Predicated region
    $region9: #{tpu_custom_call.1} parent=5 // pred_check
      _
    $region10: #{tpu_custom_call.1} parent=5 // pred_check_branch
      %94 = sbr.rel (%p91) target = $region12
    $region11: #{tpu_custom_call.1} parent=5 // pred_region
      %s95 = ssub.s32 %s8, 1
      // Predicated region
      $region13: #{tpu_custom_call.1} parent=11 // pred_check
        %p96 = pneg %p55
      $region14: #{tpu_custom_call.1} parent=11 // pred_check_branch
        %98 = sbr.rel (%p96) target = $region16
      $region15: #{tpu_custom_call.1} parent=11 // pred_region
        _
      $region16: #{tpu_custom_call.1} parent=11 // pred_fallthru
        _
    $region12: #{tpu_custom_call.1} parent=5 // pred_fallthru
      _
    %p99 = scmp.lt.s32.totalorder %s8, 2
    // Predicated region
    $region17: #{tpu_custom_call.1} parent=5 // pred_check
      %p100 = pneg %p99
    $region18: #{tpu_custom_call.1} parent=5 // pred_check_branch
      %102 = sbr.rel (%p100) target = $region20
    $region19: #{tpu_custom_call.1} parent=5 // pred_region
      // Predicated region
      $region21: #{tpu_custom_call.1} parent=19 // pred_check
        %p103 = pneg %p28
      $region22: #{tpu_custom_call.1} parent=19 // pred_check_branch
        %105 = sbr.rel (%p103) target = $region24
      $region23: #{tpu_custom_call.1} parent=19 // pred_region
        %s106 = smul.u32 16, %s8
        %p107 = scmp.lt.s32.totalorder %s106, 31
        %s108 = scalar_select %p107, %s106, 31
        %s109 = smul.addr %s108, 8
        %s110 = scalar_lea.vmem %s0, %s109
        %s111 = smul.u32 16, %s8
      $region24: #{tpu_custom_call.1} parent=19 // pred_fallthru
        _
    $region20: #{tpu_custom_call.1} parent=5 // pred_fallthru
      _
    %p112 = scmp.le.s32.totalorder 1, %s8
    %p113 = scmp.lt.s32.totalorder %s8, 3
    %p114 = pnand %p112, %p113
    %p115 = pneg %p114
    // Predicated region
    $region25: #{tpu_custom_call.1} parent=5 // pred_check
      _
    $region26: #{tpu_custom_call.1} parent=5 // pred_check_branch
      %117 = sbr.rel (%p114) target = $region28
    $region27: #{tpu_custom_call.1} parent=5 // pred_region
      %s118 = ssub.s32 %s8, 1
      %s119 = smul.u32 16, %s13
      %p120 = scmp.lt.s32.totalorder %s119, 31
      %s121 = scalar_select %p120, %s119, 31
      %s122 = smul.addr %s121, 8
      %s123 = scalar_lea.vmem %s0, %s122
      %p124 = pneg %p34
      %p125 = pneg %p31
      %p126 = pneg %p55
      %p127 = pneg %p52
      %p128 = pneg %p81
      %p129 = pneg %p78
      %s130 = smul.u32 16, %s13
      %p131 = scmp.lt.s32.totalorder %s130, 31
      %s132 = scalar_select %p131, %s130, 31
      %s133 = smul.addr %s132, 8
      %s134 = scalar_lea.vmem %s2, %s133
      %s135 = smul.u32 16, %s13
      %p136 = scmp.lt.s32.totalorder %s135, 31
      %s137 = scalar_select %p136, %s135, 31
      %s138 = smul.addr %s137, 8
      %s139 = scalar_lea.vmem %s0, %s138
      %s140 = smul.u32 16, %s13
      %s141 = smul.u32 16, %s13
      %p142 = scmp.lt.s32.totalorder %s141, 31
      %s143 = scalar_select %p142, %s141, 31
      %s144 = smul.addr %s143, 8
      %s145 = scalar_lea.vmem %s2, %s144
      %s146 = smul.u32 16, %s13
      %v147 = vld [vmem:[%s139] sm:$0xff]
      %v148 = vld [vmem:[%s139 + $0x8] sm:$0xff]
      %v149 = vld [vmem:[%s139 + $0x10] sm:$0xff]
      %v150 = vld [vmem:[%s139 + $0x18] sm:$0xff]
      %v151 = vld [vmem:[%s139 + $0x20] sm:$0xff]
      %v152 = vld [vmem:[%s139 + $0x28] sm:$0xff]
      %v153 = vld [vmem:[%s139 + $0x30] sm:$0xff]
      %v154 = vld [vmem:[%s139 + $0x38] sm:$0xff]
      %v155 = vld [vmem:[%s139 + $0x40] sm:$0xff]
      %v156 = vld [vmem:[%s139 + $0x48] sm:$0xff]
      %v157 = vld [vmem:[%s139 + $0x50] sm:$0xff]
      %v158 = vld [vmem:[%s139 + $0x58] sm:$0xff]
      %v159 = vld [vmem:[%s139 + $0x60] sm:$0xff]
      %v160 = vld [vmem:[%s139 + $0x68] sm:$0xff]
      %v161 = vld [vmem:[%s139 + $0x70] sm:$0xff]
      %v162 = vld [vmem:[%s139 + $0x78] sm:$0xff]
      %v163 = vld [vmem:[%s1 + $0x20] sm:$0x1]
      %v164 = vld [vmem:[%s1] sm:$0x1]
      %166 = vset.pattern.permute.xlu0 0
      %167 = vperm.xlu0 %166, %v147
      %v168 = vpop.permute.xlu0 %167
      %171 = vset.pattern.permute.xlu0 0
      %172 = vperm.xlu0 %171, %v148
      %v173 = vpop.permute.xlu0 %172
      %176 = vset.pattern.permute.xlu0 0
      %177 = vperm.xlu0 %176, %v149
      %v178 = vpop.permute.xlu0 %177
      %181 = vset.pattern.permute.xlu0 0
      %182 = vperm.xlu0 %181, %v150
      %v183 = vpop.permute.xlu0 %182
      %186 = vset.pattern.permute.xlu0 0
      %187 = vperm.xlu0 %186, %v151
      %v188 = vpop.permute.xlu0 %187
      %191 = vset.pattern.permute.xlu0 0
      %192 = vperm.xlu0 %191, %v152
      %v193 = vpop.permute.xlu0 %192
      %196 = vset.pattern.permute.xlu0 0
      %197 = vperm.xlu0 %196, %v153
      %v198 = vpop.permute.xlu0 %197
      %201 = vset.pattern.permute.xlu0 0
      %202 = vperm.xlu0 %201, %v154
      %v203 = vpop.permute.xlu0 %202
      %206 = vset.pattern.permute.xlu0 0
      %207 = vperm.xlu0 %206, %v155
      %v208 = vpop.permute.xlu0 %207
      %211 = vset.pattern.permute.xlu0 0
      %212 = vperm.xlu0 %211, %v156
      %v213 = vpop.permute.xlu0 %212
      %216 = vset.pattern.permute.xlu0 0
      %217 = vperm.xlu0 %216, %v157
      %v218 = vpop.permute.xlu0 %217
      %221 = vset.pattern.permute.xlu0 0
      %222 = vperm.xlu0 %221, %v158
      %v223 = vpop.permute.xlu0 %222
      %226 = vset.pattern.permute.xlu0 0
      %227 = vperm.xlu0 %226, %v159
      %v228 = vpop.permute.xlu0 %227
      %231 = vset.pattern.permute.xlu0 0
      %232 = vperm.xlu0 %231, %v160
      %v233 = vpop.permute.xlu0 %232
      %236 = vset.pattern.permute.xlu0 0
      %237 = vperm.xlu0 %236, %v161
      %v238 = vpop.permute.xlu0 %237
      %241 = vset.pattern.permute.xlu0 0
      %242 = vperm.xlu0 %241, %v162
      %v243 = vpop.permute.xlu0 %242
      %v245 = vlaneseq
      %v246 = vshrl.u32 %v245, 7
      %v247 = vsub.s32 0, %v246
      %v248 = vrot.slane %v164, %v247
      %v249 = vmul.f32 %v168, %v248
      %v250 = vmul.f32 %v173, %v248
      %v251 = vmul.f32 %v178, %v248
      %v252 = vmul.f32 %v183, %v248
      %v253 = vmul.f32 %v188, %v248
      %v254 = vmul.f32 %v193, %v248
      %v255 = vmul.f32 %v198, %v248
      %v256 = vmul.f32 %v203, %v248
      %v257 = vmul.f32 %v208, %v248
      %v258 = vmul.f32 %v213, %v248
      %v259 = vmul.f32 %v218, %v248
      %v260 = vmul.f32 %v223, %v248
      %v261 = vmul.f32 %v228, %v248
      %v262 = vmul.f32 %v233, %v248
      %v263 = vmul.f32 %v238, %v248
      %v264 = vmul.f32 %v243, %v248
      %v265 = vlaneseq
      %v266 = vshrl.u32 %v265, 7
      %v267 = vsub.s32 0, %v266
      %v268 = vrot.slane %v163, %v267
      %v269 = vadd.f32 %v268, %v249
      %v270 = vadd.f32 %v268, %v250
      %v271 = vadd.f32 %v268, %v251
      %v272 = vadd.f32 %v268, %v252
      %v273 = vadd.f32 %v268, %v253
      %v274 = vadd.f32 %v268, %v254
      %v275 = vadd.f32 %v268, %v255
      %v276 = vadd.f32 %v268, %v256
      %v277 = vadd.f32 %v268, %v257
      %v278 = vadd.f32 %v268, %v258
      %v279 = vadd.f32 %v268, %v259
      %v280 = vadd.f32 %v268, %v260
      %v281 = vadd.f32 %v268, %v261
      %v282 = vadd.f32 %v268, %v262
      %v283 = vadd.f32 %v268, %v263
      %v284 = vadd.f32 %v268, %v264
      %v285 = vld [vmem:[%s1 + $0x1] sm:$0x1]
      %286 = vset.pattern.permute.xlu0 1
      %287 = vperm.xlu0 %286, %v147
      %v288 = vpop.permute.xlu0 %287
      %290 = vset.pattern.permute.xlu0 1
      %291 = vperm.xlu0 %290, %v148
      %v292 = vpop.permute.xlu0 %291
      %294 = vset.pattern.permute.xlu0 1
      %295 = vperm.xlu0 %294, %v149
      %v296 = vpop.permute.xlu0 %295
      %298 = vset.pattern.permute.xlu0 1
      %299 = vperm.xlu0 %298, %v150
      %v300 = vpop.permute.xlu0 %299
      %302 = vset.pattern.permute.xlu0 1
      %303 = vperm.xlu0 %302, %v151
      %v304 = vpop.permute.xlu0 %303
      %306 = vset.pattern.permute.xlu0 1
      %307 = vperm.xlu0 %306, %v152
      %v308 = vpop.permute.xlu0 %307
      %310 = vset.pattern.permute.xlu0 1
      %311 = vperm.xlu0 %310, %v153
      %v312 = vpop.permute.xlu0 %311
      %314 = vset.pattern.permute.xlu0 1
      %315 = vperm.xlu0 %314, %v154
      %v316 = vpop.permute.xlu0 %315
      %318 = vset.pattern.permute.xlu0 1
      %319 = vperm.xlu0 %318, %v155
      %v320 = vpop.permute.xlu0 %319
      %322 = vset.pattern.permute.xlu0 1
      %323 = vperm.xlu0 %322, %v156
      %v324 = vpop.permute.xlu0 %323
      %326 = vset.pattern.permute.xlu0 1
      %327 = vperm.xlu0 %326, %v157
      %v328 = vpop.permute.xlu0 %327
      %330 = vset.pattern.permute.xlu0 1
      %331 = vperm.xlu0 %330, %v158
      %v332 = vpop.permute.xlu0 %331
      %334 = vset.pattern.permute.xlu0 1
      %335 = vperm.xlu0 %334, %v159
      %v336 = vpop.permute.xlu0 %335
      %338 = vset.pattern.permute.xlu0 1
      %339 = vperm.xlu0 %338, %v160
      %v340 = vpop.permute.xlu0 %339
      %342 = vset.pattern.permute.xlu0 1
      %343 = vperm.xlu0 %342, %v161
      %v344 = vpop.permute.xlu0 %343
      %346 = vset.pattern.permute.xlu0 1
      %347 = vperm.xlu0 %346, %v162
      %v348 = vpop.permute.xlu0 %347
      %v350 = vlaneseq
      %v351 = vshrl.u32 %v350, 7
      %v352 = vsub.s32 0, %v351
      %v353 = vrot.slane %v285, %v352
      %v354 = vmul.f32 %v288, %v353
      %v355 = vmul.f32 %v292, %v353
      %v356 = vmul.f32 %v296, %v353
      %v357 = vmul.f32 %v300, %v353
      %v358 = vmul.f32 %v304, %v353
      %v359 = vmul.f32 %v308, %v353
      %v360 = vmul.f32 %v312, %v353
      %v361 = vmul.f32 %v316, %v353
      %v362 = vmul.f32 %v320, %v353
      %v363 = vmul.f32 %v324, %v353
      %v364 = vmul.f32 %v328, %v353
      %v365 = vmul.f32 %v332, %v353
      %v366 = vmul.f32 %v336, %v353
      %v367 = vmul.f32 %v340, %v353
      %v368 = vmul.f32 %v344, %v353
      %v369 = vmul.f32 %v348, %v353
      %v370 = vadd.f32 %v269, %v354
      %v371 = vadd.f32 %v270, %v355
      %v372 = vadd.f32 %v271, %v356
      %v373 = vadd.f32 %v272, %v357
      %v374 = vadd.f32 %v273, %v358
      %v375 = vadd.f32 %v274, %v359
      %v376 = vadd.f32 %v275, %v360
      %v377 = vadd.f32 %v276, %v361
      %v378 = vadd.f32 %v277, %v362
      %v379 = vadd.f32 %v278, %v363
      %v380 = vadd.f32 %v279, %v364
      %v381 = vadd.f32 %v280, %v365
      %v382 = vadd.f32 %v281, %v366
      %v383 = vadd.f32 %v282, %v367
      %v384 = vadd.f32 %v283, %v368
      %v385 = vadd.f32 %v284, %v369
      %v386 = vld [vmem:[%s1 + $0x2] sm:$0x1]
      %387 = vset.pattern.permute.xlu0 2
      %388 = vperm.xlu0 %387, %v147
      %v389 = vpop.permute.xlu0 %388
      %391 = vset.pattern.permute.xlu0 2
      %392 = vperm.xlu0 %391, %v148
      %v393 = vpop.permute.xlu0 %392
      %395 = vset.pattern.permute.xlu0 2
      %396 = vperm.xlu0 %395, %v149
      %v397 = vpop.permute.xlu0 %396
      %399 = vset.pattern.permute.xlu0 2
      %400 = vperm.xlu0 %399, %v150
      %v401 = vpop.permute.xlu0 %400
      %403 = vset.pattern.permute.xlu0 2
      %404 = vperm.xlu0 %403, %v151
      %v405 = vpop.permute.xlu0 %404
      %407 = vset.pattern.permute.xlu0 2
      %408 = vperm.xlu0 %407, %v152
      %v409 = vpop.permute.xlu0 %408
      %411 = vset.pattern.permute.xlu0 2
      %412 = vperm.xlu0 %411, %v153
      %v413 = vpop.permute.xlu0 %412
      %415 = vset.pattern.permute.xlu0 2
      %416 = vperm.xlu0 %415, %v154
      %v417 = vpop.permute.xlu0 %416
      %419 = vset.pattern.permute.xlu0 2
      %420 = vperm.xlu0 %419, %v155
      %v421 = vpop.permute.xlu0 %420
      %423 = vset.pattern.permute.xlu0 2
      %424 = vperm.xlu0 %423, %v156
      %v425 = vpop.permute.xlu0 %424
      %427 = vset.pattern.permute.xlu0 2
      %428 = vperm.xlu0 %427, %v157
      %v429 = vpop.permute.xlu0 %428
      %431 = vset.pattern.permute.xlu0 2
      %432 = vperm.xlu0 %431, %v158
      %v433 = vpop.permute.xlu0 %432
      %435 = vset.pattern.permute.xlu0 2
      %436 = vperm.xlu0 %435, %v159
      %v437 = vpop.permute.xlu0 %436
      %439 = vset.pattern.permute.xlu0 2
      %440 = vperm.xlu0 %439, %v160
      %v441 = vpop.permute.xlu0 %440
      %443 = vset.pattern.permute.xlu0 2
      %444 = vperm.xlu0 %443, %v161
      %v445 = vpop.permute.xlu0 %444
      %447 = vset.pattern.permute.xlu0 2
      %448 = vperm.xlu0 %447, %v162
      %v449 = vpop.permute.xlu0 %448
      %v451 = vlaneseq
      %v452 = vshrl.u32 %v451, 7
      %v453 = vsub.s32 0, %v452
      %v454 = vrot.slane %v386, %v453
      %v455 = vmul.f32 %v389, %v454
      %v456 = vmul.f32 %v393, %v454
      %v457 = vmul.f32 %v397, %v454
      %v458 = vmul.f32 %v401, %v454
      %v459 = vmul.f32 %v405, %v454
      %v460 = vmul.f32 %v409, %v454
      %v461 = vmul.f32 %v413, %v454
      %v462 = vmul.f32 %v417, %v454
      %v463 = vmul.f32 %v421, %v454
      %v464 = vmul.f32 %v425, %v454
      %v465 = vmul.f32 %v429, %v454
      %v466 = vmul.f32 %v433, %v454
      %v467 = vmul.f32 %v437, %v454
      %v468 = vmul.f32 %v441, %v454
      %v469 = vmul.f32 %v445, %v454
      %v470 = vmul.f32 %v449, %v454
      %v471 = vadd.f32 %v370, %v455
      %v472 = vadd.f32 %v371, %v456
      %v473 = vadd.f32 %v372, %v457
      %v474 = vadd.f32 %v373, %v458
      %v475 = vadd.f32 %v374, %v459
      %v476 = vadd.f32 %v375, %v460
      %v477 = vadd.f32 %v376, %v461
      %v478 = vadd.f32 %v377, %v462
      %v479 = vadd.f32 %v378, %v463
      %v480 = vadd.f32 %v379, %v464
      %v481 = vadd.f32 %v380, %v465
      %v482 = vadd.f32 %v381, %v466
      %v483 = vadd.f32 %v382, %v467
      %v484 = vadd.f32 %v383, %v468
      %v485 = vadd.f32 %v384, %v469
      %v486 = vadd.f32 %v385, %v470
      %v487 = vtanh.pop %v471
      %v488 = vtanh.pop %v472
      %v489 = vtanh.pop %v473
      %v490 = vtanh.pop %v474
      %v491 = vtanh.pop %v475
      %v492 = vtanh.pop %v476
      %v493 = vtanh.pop %v477
      %v494 = vtanh.pop %v478
      %v495 = vtanh.pop %v479
      %v496 = vtanh.pop %v480
      %v497 = vtanh.pop %v481
      %v498 = vtanh.pop %v482
      %v499 = vtanh.pop %v483
      %v500 = vtanh.pop %v484
      %v501 = vtanh.pop %v485
      %v502 = vtanh.pop %v486
      %s503 = scalar_lea.vmem %s1, 40
      %v504 = vld [vmem:[%s503 + $0x20] sm:$0x1]
      %v505 = vld [vmem:[%s503] sm:$0xff]
      %v506 = vld [vmem:[%s503 + $0x8] sm:$0xff]
      %v507 = vld [vmem:[%s503 + $0x10] sm:$0xff]
      %v508 = vld [vmem:[%s503 + $0x18] sm:$0xff]
      %vm509 = vcmask 261120
      %v511 = vsel %vm509, %v487, 0
      %v514 = vsel %vm509, %v488, 0
      %v517 = vsel %vm509, %v489, 0
      %v520 = vsel %vm509, %v490, 0
      %v523 = vsel %vm509, %v491, 0
      %v526 = vsel %vm509, %v492, 0
      %v529 = vsel %vm509, %v493, 0
      %v532 = vsel %vm509, %v494, 0
      %v535 = vsel %vm509, %v495, 0
      %v538 = vsel %vm509, %v496, 0
      %v541 = vsel %vm509, %v497, 0
      %v544 = vsel %vm509, %v498, 0
      %v547 = vsel %vm509, %v499, 0
      %v550 = vsel %vm509, %v500, 0
      %v553 = vsel %vm509, %v501, 0
      %v556 = vsel %vm509, %v502, 0
      %558 = vmatprep.subr.mxu0 0.0
      %559 = vmatpush1.msra.mxu0 %v505
      %560 = vmatprep.subr.mxu0 0.0
      %561 = vmatpush1.msra.mxu0 %v506
      %562 = vmatprep.subr.mxu0 0.0
      %563 = vmatpush1.msra.mxu0 %v507
      %564 = vmatprep.subr.mxu0 0.0
      %565 = vmatpush1.msra.mxu0 %v508
      %566 = vmatprep.subr.mxu0 0.0
      %567 = vmatpush1.msra.mxu0 0.0
      %568 = vmatprep.subr.mxu0 0.0
      %569 = vmatpush1.msra.mxu0 0.0
      %570 = vmatprep.subr.mxu0 0.0
      %571 = vmatpush1.msra.mxu0 0.0
      %572 = vmatprep.subr.mxu0 0.0
      %573 = vmatpush1.msra.mxu0 0.0
      %574 = vmatprep.subr.mxu0 0.0
      %575 = vmatpush1.msra.mxu0 0.0
      %576 = vmatprep.subr.mxu0 0.0
      %577 = vmatpush1.msra.mxu0 0.0
      %578 = vmatprep.subr.mxu0 0.0
      %579 = vmatpush1.msra.mxu0 0.0
      %580 = vmatprep.subr.mxu0 0.0
      %581 = vmatpush1.msra.mxu0 0.0
      %582 = vmatprep.subr.mxu0 0.0
      %583 = vmatpush1.msra.mxu0 0.0
      %584 = vmatprep.subr.mxu0 0.0
      %585 = vmatpush1.msra.mxu0 0.0
      %586 = vmatprep.subr.mxu0 0.0
      %587 = vmatpush1.msra.mxu0 0.0
      %588 = vmatprep.subr.mxu0 0.0
      %589 = vmatpush1.msra.mxu0 0.0
      %590 = vmatprep.subr.mxu0 0.0
      %591 = vmatpush1.msra.mxu0 0.0
      %592 = vmatprep.subr.mxu0 0.0
      %593 = vmatpush1.msra.mxu0 0.0
      %594 = vmatprep.subr.mxu0 0.0
      %595 = vmatpush1.msra.mxu0 0.0
      %596 = vmatprep.subr.mxu0 0.0
      %597 = vmatpush1.msra.mxu0 0.0
      %598 = vmatprep.subr.mxu0 0.0
      %599 = vmatpush1.msra.mxu0 0.0
      %600 = vmatprep.subr.mxu0 0.0
      %601 = vmatpush1.msra.mxu0 0.0
      %602 = vmatprep.subr.mxu0 0.0
      %603 = vmatpush1.msra.mxu0 0.0
      %604 = vmatprep.subr.mxu0 0.0
      %605 = vmatpush1.msra.mxu0 0.0
      %606 = vmatprep.subr.mxu0 0.0
      %607 = vmatpush1.msra.mxu0 0.0
      %608 = vmatprep.subr.mxu0 0.0
      %609 = vmatpush1.msra.mxu0 0.0
      %610 = vmatprep.subr.mxu0 0.0
      %611 = vmatpush1.msra.mxu0 0.0
      %612 = vmatprep.subr.mxu0 0.0
      %613 = vmatpush1.msra.mxu0 0.0
      %614 = vmatprep.subr.mxu0 0.0
      %615 = vmatpush1.msra.mxu0 0.0
      %616 = vmatprep.subr.mxu0 0.0
      %617 = vmatpush1.msra.mxu0 0.0
      %618 = vmatprep.subr.mxu0 0.0
      %619 = vmatpush1.msra.mxu0 0.0
      %620 = vmatprep.subr.mxu0 0.0
      %621 = vmatpush1.msra.mxu0 0.0
      %622 = vmatprep.mubr.f32.mxu0 0.0
      %623 = vmatmul.mubr.f32.gmra.mrb[0].mxu0 %v511
      %v624 = vpop.f32.mrb[0].mxu0
      %v625 = vadd.f32 0.0, %v624
      %v626 = vpop.f32.mrb[0].mxu0
      %627 = vmatprep.mubr.f32.mxu0 0.0
      %628 = vmatmul.mubr.f32.gmra.mrb[0].mxu0 %v514
      %v629 = vpop.f32.mrb[0].mxu0
      %v630 = vadd.f32 0.0, %v629
      %v631 = vpop.f32.mrb[0].mxu0
      %632 = vmatprep.mubr.f32.mxu0 0.0
      %633 = vmatmul.mubr.f32.gmra.mrb[0].mxu0 %v517
      %v634 = vpop.f32.mrb[0].mxu0
      %v635 = vadd.f32 0.0, %v634
      %v636 = vpop.f32.mrb[0].mxu0
      %637 = vmatprep.mubr.f32.mxu0 0.0
      %638 = vmatmul.mubr.f32.gmra.mrb[0].mxu0 %v520
      %v639 = vpop.f32.mrb[0].mxu0
      %v640 = vadd.f32 0.0, %v639
      %v641 = vpop.f32.mrb[0].mxu0
      %642 = vmatprep.mubr.f32.mxu0 0.0
      %643 = vmatmul.mubr.f32.gmra.mrb[0].mxu0 %v523
      %v644 = vpop.f32.mrb[0].mxu0
      %v645 = vadd.f32 0.0, %v644
      %v646 = vpop.f32.mrb[0].mxu0
      %647 = vmatprep.mubr.f32.mxu0 0.0
      %648 = vmatmul.mubr.f32.gmra.mrb[0].mxu0 %v526
      %v649 = vpop.f32.mrb[0].mxu0
      %v650 = vadd.f32 0.0, %v649
      %v651 = vpop.f32.mrb[0].mxu0
      %652 = vmatprep.mubr.f32.mxu0 0.0
      %653 = vmatmul.mubr.f32.gmra.mrb[0].mxu0 %v529
      %v654 = vpop.f32.mrb[0].mxu0
      %v655 = vadd.f32 0.0, %v654
      %v656 = vpop.f32.mrb[0].mxu0
      %657 = vmatprep.mubr.f32.mxu0 0.0
      %658 = vmatmul.mubr.f32.gmra.mrb[0].mxu0 %v532
      %v659 = vpop.f32.mrb[0].mxu0
      %v660 = vadd.f32 0.0, %v659
      %v661 = vpop.f32.mrb[0].mxu0
      %662 = vmatprep.mubr.f32.mxu0 0.0
      %663 = vmatmul.mubr.f32.gmra.mrb[0].mxu0 %v535
      %v664 = vpop.f32.mrb[0].mxu0
      %v665 = vadd.f32 0.0, %v664
      %v666 = vpop.f32.mrb[0].mxu0
      %667 = vmatprep.mubr.f32.mxu0 0.0
      %668 = vmatmul.mubr.f32.gmra.mrb[0].mxu0 %v538
      %v669 = vpop.f32.mrb[0].mxu0
      %v670 = vadd.f32 0.0, %v669
      %v671 = vpop.f32.mrb[0].mxu0
      %672 = vmatprep.mubr.f32.mxu0 0.0
      %673 = vmatmul.mubr.f32.gmra.mrb[0].mxu0 %v541
      %v674 = vpop.f32.mrb[0].mxu0
      %v675 = vadd.f32 0.0, %v674
      %v676 = vpop.f32.mrb[0].mxu0
      %677 = vmatprep.mubr.f32.mxu0 0.0
      %678 = vmatmul.mubr.f32.gmra.mrb[0].mxu0 %v544
      %v679 = vpop.f32.mrb[0].mxu0
      %v680 = vadd.f32 0.0, %v679
      %v681 = vpop.f32.mrb[0].mxu0
      %682 = vmatprep.mubr.f32.mxu0 0.0
      %683 = vmatmul.mubr.f32.gmra.mrb[0].mxu0 %v547
      %v684 = vpop.f32.mrb[0].mxu0
      %v685 = vadd.f32 0.0, %v684
      %v686 = vpop.f32.mrb[0].mxu0
      %687 = vmatprep.mubr.f32.mxu0 0.0
      %688 = vmatmul.mubr.f32.gmra.mrb[0].mxu0 %v550
      %v689 = vpop.f32.mrb[0].mxu0
      %v690 = vadd.f32 0.0, %v689
      %v691 = vpop.f32.mrb[0].mxu0
      %692 = vmatprep.mubr.f32.mxu0 0.0
      %693 = vmatmul.mubr.f32.gmra.mrb[0].mxu0 %v553
      %v694 = vpop.f32.mrb[0].mxu0
      %v695 = vadd.f32 0.0, %v694
      %v696 = vpop.f32.mrb[0].mxu0
      %697 = vmatprep.mubr.f32.mxu0 0.0
      %698 = vmatmul.mubr.f32.gmra.mrb[0].mxu0 %v556
      %v699 = vpop.f32.mrb[0].mxu0
      %v700 = vadd.f32 0.0, %v699
      %v701 = vpop.f32.mrb[0].mxu0
      %702 = vdwg.mxu0
      %v703 = vlaneseq
      %v704 = vshrl.u32 %v703, 7
      %v705 = vsub.s32 0, %v704
      %v706 = vrot.slane %v504, %v705
      %v707 = vadd.f32 %v706, %v625
      %v708 = vadd.f32 %v706, %v630
      %v709 = vadd.f32 %v706, %v635
      %v710 = vadd.f32 %v706, %v640
      %v711 = vadd.f32 %v706, %v645
      %v712 = vadd.f32 %v706, %v650
      %v713 = vadd.f32 %v706, %v655
      %v714 = vadd.f32 %v706, %v660
      %v715 = vadd.f32 %v706, %v665
      %v716 = vadd.f32 %v706, %v670
      %v717 = vadd.f32 %v706, %v675
      %v718 = vadd.f32 %v706, %v680
      %v719 = vadd.f32 %v706, %v685
      %v720 = vadd.f32 %v706, %v690
      %v721 = vadd.f32 %v706, %v695
      %v722 = vadd.f32 %v706, %v700
      %v723 = vtanh.pop %v707
      %v724 = vtanh.pop %v708
      %v725 = vtanh.pop %v709
      %v726 = vtanh.pop %v710
      %v727 = vtanh.pop %v711
      %v728 = vtanh.pop %v712
      %v729 = vtanh.pop %v713
      %v730 = vtanh.pop %v714
      %v731 = vtanh.pop %v715
      %v732 = vtanh.pop %v716
      %v733 = vtanh.pop %v717
      %v734 = vtanh.pop %v718
      %v735 = vtanh.pop %v719
      %v736 = vtanh.pop %v720
      %v737 = vtanh.pop %v721
      %v738 = vtanh.pop %v722
      %s739 = scalar_lea.vmem %s1, 80
      %v740 = vld [vmem:[%s739 + $0x20] sm:$0x1]
      %v741 = vld [vmem:[%s739] sm:$0xff]
      %v742 = vld [vmem:[%s739 + $0x8] sm:$0xff]
      %v743 = vld [vmem:[%s739 + $0x10] sm:$0xff]
      %v744 = vld [vmem:[%s739 + $0x18] sm:$0xff]
      %v746 = vsel %vm509, %v723, 0
      %v749 = vsel %vm509, %v724, 0
      %v752 = vsel %vm509, %v725, 0
      %v755 = vsel %vm509, %v726, 0
      %v758 = vsel %vm509, %v727, 0
      %v761 = vsel %vm509, %v728, 0
      %v764 = vsel %vm509, %v729, 0
      %v767 = vsel %vm509, %v730, 0
      %v770 = vsel %vm509, %v731, 0
      %v773 = vsel %vm509, %v732, 0
      %v776 = vsel %vm509, %v733, 0
      %v779 = vsel %vm509, %v734, 0
      %v782 = vsel %vm509, %v735, 0
      %v785 = vsel %vm509, %v736, 0
      %v788 = vsel %vm509, %v737, 0
      %v791 = vsel %vm509, %v738, 0
      %793 = vmatprep.subr.mxu0 0.0
      %794 = vmatpush1.msra.mxu0 %v741
      %795 = vmatprep.subr.mxu0 0.0
      %796 = vmatpush1.msra.mxu0 %v742
      %797 = vmatprep.subr.mxu0 0.0
      %798 = vmatpush1.msra.mxu0 %v743
      %799 = vmatprep.subr.mxu0 0.0
      %800 = vmatpush1.msra.mxu0 %v744
      %801 = vmatprep.subr.mxu0 0.0
      %802 = vmatpush1.msra.mxu0 0.0
      %803 = vmatprep.subr.mxu0 0.0
      %804 = vmatpush1.msra.mxu0 0.0
      %805 = vmatprep.subr.mxu0 0.0
      %806 = vmatpush1.msra.mxu0 0.0
      %807 = vmatprep.subr.mxu0 0.0
      %808 = vmatpush1.msra.mxu0 0.0
      %809 = vmatprep.subr.mxu0 0.0
      %810 = vmatpush1.msra.mxu0 0.0
      %811 = vmatprep.subr.mxu0 0.0
      %812 = vmatpush1.msra.mxu0 0.0
      %813 = vmatprep.subr.mxu0 0.0
      %814 = vmatpush1.msra.mxu0 0.0
      %815 = vmatprep.subr.mxu0 0.0
      %816 = vmatpush1.msra.mxu0 0.0
      %817 = vmatprep.subr.mxu0 0.0
      %818 = vmatpush1.msra.mxu0 0.0
      %819 = vmatprep.subr.mxu0 0.0
      %820 = vmatpush1.msra.mxu0 0.0
      %821 = vmatprep.subr.mxu0 0.0
      %822 = vmatpush1.msra.mxu0 0.0
      %823 = vmatprep.subr.mxu0 0.0
      %824 = vmatpush1.msra.mxu0 0.0
      %825 = vmatprep.subr.mxu0 0.0
      %826 = vmatpush1.msra.mxu0 0.0
      %827 = vmatprep.subr.mxu0 0.0
      %828 = vmatpush1.msra.mxu0 0.0
      %829 = vmatprep.subr.mxu0 0.0
      %830 = vmatpush1.msra.mxu0 0.0
      %831 = vmatprep.subr.mxu0 0.0
      %832 = vmatpush1.msra.mxu0 0.0
      %833 = vmatprep.subr.mxu0 0.0
      %834 = vmatpush1.msra.mxu0 0.0
      %835 = vmatprep.subr.mxu0 0.0
      %836 = vmatpush1.msra.mxu0 0.0
      %837 = vmatprep.subr.mxu0 0.0
      %838 = vmatpush1.msra.mxu0 0.0
      %839 = vmatprep.subr.mxu0 0.0
      %840 = vmatpush1.msra.mxu0 0.0
      %841 = vmatprep.subr.mxu0 0.0
      %842 = vmatpush1.msra.mxu0 0.0
      %843 = vmatprep.subr.mxu0 0.0
      %844 = vmatpush1.msra.mxu0 0.0
      %845 = vmatprep.subr.mxu0 0.0
      %846 = vmatpush1.msra.mxu0 0.0
      %847 = vmatprep.subr.mxu0 0.0
      %848 = vmatpush1.msra.mxu0 0.0
      %849 = vmatprep.subr.mxu0 0.0
      %850 = vmatpush1.msra.mxu0 0.0
      %851 = vmatprep.subr.mxu0 0.0
      %852 = vmatpush1.msra.mxu0 0.0
      %853 = vmatprep.subr.mxu0 0.0
      %854 = vmatpush1.msra.mxu0 0.0
      %855 = vmatprep.subr.mxu0 0.0
      %856 = vmatpush1.msra.mxu0 0.0
      %857 = vmatprep.mubr.f32.mxu0 0.0
      %858 = vmatmul.mubr.f32.gmra.mrb[0].mxu0 %v746
      %v859 = vpop.f32.mrb[0].mxu0
      %v860 = vadd.f32 0.0, %v859
      %v861 = vpop.f32.mrb[0].mxu0
      %862 = vmatprep.mubr.f32.mxu0 0.0
      %863 = vmatmul.mubr.f32.gmra.mrb[0].mxu0 %v749
      %v864 = vpop.f32.mrb[0].mxu0
      %v865 = vadd.f32 0.0, %v864
      %v866 = vpop.f32.mrb[0].mxu0
      %867 = vmatprep.mubr.f32.mxu0 0.0
      %868 = vmatmul.mubr.f32.gmra.mrb[0].mxu0 %v752
      %v869 = vpop.f32.mrb[0].mxu0
      %v870 = vadd.f32 0.0, %v869
      %v871 = vpop.f32.mrb[0].mxu0
      %872 = vmatprep.mubr.f32.mxu0 0.0
      %873 = vmatmul.mubr.f32.gmra.mrb[0].mxu0 %v755
      %v874 = vpop.f32.mrb[0].mxu0
      %v875 = vadd.f32 0.0, %v874
      %v876 = vpop.f32.mrb[0].mxu0
      %877 = vmatprep.mubr.f32.mxu0 0.0
      %878 = vmatmul.mubr.f32.gmra.mrb[0].mxu0 %v758
      %v879 = vpop.f32.mrb[0].mxu0
      %v880 = vadd.f32 0.0, %v879
      %v881 = vpop.f32.mrb[0].mxu0
      %882 = vmatprep.mubr.f32.mxu0 0.0
      %883 = vmatmul.mubr.f32.gmra.mrb[0].mxu0 %v761
      %v884 = vpop.f32.mrb[0].mxu0
      %v885 = vadd.f32 0.0, %v884
      %v886 = vpop.f32.mrb[0].mxu0
      %887 = vmatprep.mubr.f32.mxu0 0.0
      %888 = vmatmul.mubr.f32.gmra.mrb[0].mxu0 %v764
      %v889 = vpop.f32.mrb[0].mxu0
      %v890 = vadd.f32 0.0, %v889
      %v891 = vpop.f32.mrb[0].mxu0
      %892 = vmatprep.mubr.f32.mxu0 0.0
      %893 = vmatmul.mubr.f32.gmra.mrb[0].mxu0 %v767
      %v894 = vpop.f32.mrb[0].mxu0
      %v895 = vadd.f32 0.0, %v894
      %v896 = vpop.f32.mrb[0].mxu0
      %897 = vmatprep.mubr.f32.mxu0 0.0
      %898 = vmatmul.mubr.f32.gmra.mrb[0].mxu0 %v770
      %v899 = vpop.f32.mrb[0].mxu0
      %v900 = vadd.f32 0.0, %v899
      %v901 = vpop.f32.mrb[0].mxu0
      %902 = vmatprep.mubr.f32.mxu0 0.0
      %903 = vmatmul.mubr.f32.gmra.mrb[0].mxu0 %v773
      %v904 = vpop.f32.mrb[0].mxu0
      %v905 = vadd.f32 0.0, %v904
      %v906 = vpop.f32.mrb[0].mxu0
      %907 = vmatprep.mubr.f32.mxu0 0.0
      %908 = vmatmul.mubr.f32.gmra.mrb[0].mxu0 %v776
      %v909 = vpop.f32.mrb[0].mxu0
      %v910 = vadd.f32 0.0, %v909
      %v911 = vpop.f32.mrb[0].mxu0
      %912 = vmatprep.mubr.f32.mxu0 0.0
      %913 = vmatmul.mubr.f32.gmra.mrb[0].mxu0 %v779
      %v914 = vpop.f32.mrb[0].mxu0
      %v915 = vadd.f32 0.0, %v914
      %v916 = vpop.f32.mrb[0].mxu0
      %917 = vmatprep.mubr.f32.mxu0 0.0
      %918 = vmatmul.mubr.f32.gmra.mrb[0].mxu0 %v782
      %v919 = vpop.f32.mrb[0].mxu0
      %v920 = vadd.f32 0.0, %v919
      %v921 = vpop.f32.mrb[0].mxu0
      %922 = vmatprep.mubr.f32.mxu0 0.0
      %923 = vmatmul.mubr.f32.gmra.mrb[0].mxu0 %v785
      %v924 = vpop.f32.mrb[0].mxu0
      %v925 = vadd.f32 0.0, %v924
      %v926 = vpop.f32.mrb[0].mxu0
      %927 = vmatprep.mubr.f32.mxu0 0.0
      %928 = vmatmul.mubr.f32.gmra.mrb[0].mxu0 %v788
      %v929 = vpop.f32.mrb[0].mxu0
      %v930 = vadd.f32 0.0, %v929
      %v931 = vpop.f32.mrb[0].mxu0
      %932 = vmatprep.mubr.f32.mxu0 0.0
      %933 = vmatmul.mubr.f32.gmra.mrb[0].mxu0 %v791
      %v934 = vpop.f32.mrb[0].mxu0
      %v935 = vadd.f32 0.0, %v934
      %v936 = vpop.f32.mrb[0].mxu0
      %937 = vdwg.mxu0
      %v938 = vlaneseq
      %v939 = vshrl.u32 %v938, 7
      %v940 = vsub.s32 0, %v939
      %v941 = vrot.slane %v740, %v940
      %v942 = vadd.f32 %v941, %v860
      %v943 = vadd.f32 %v941, %v865
      %v944 = vadd.f32 %v941, %v870
      %v945 = vadd.f32 %v941, %v875
      %v946 = vadd.f32 %v941, %v880
      %v947 = vadd.f32 %v941, %v885
      %v948 = vadd.f32 %v941, %v890
      %v949 = vadd.f32 %v941, %v895
      %v950 = vadd.f32 %v941, %v900
      %v951 = vadd.f32 %v941, %v905
      %v952 = vadd.f32 %v941, %v910
      %v953 = vadd.f32 %v941, %v915
      %v954 = vadd.f32 %v941, %v920
      %v955 = vadd.f32 %v941, %v925
      %v956 = vadd.f32 %v941, %v930
      %v957 = vadd.f32 %v941, %v935
      %958 = vst.msk [vmem:[%s145] sm:$0xff] %vm509, %v942
      %959 = vst.msk [vmem:[%s145 + $0x8] sm:$0xff] %vm509, %v943
      %960 = vst.msk [vmem:[%s145 + $0x10] sm:$0xff] %vm509, %v944
      %961 = vst.msk [vmem:[%s145 + $0x18] sm:$0xff] %vm509, %v945
      %962 = vst.msk [vmem:[%s145 + $0x20] sm:$0xff] %vm509, %v946
      %963 = vst.msk [vmem:[%s145 + $0x28] sm:$0xff] %vm509, %v947
      %964 = vst.msk [vmem:[%s145 + $0x30] sm:$0xff] %vm509, %v948
      %965 = vst.msk [vmem:[%s145 + $0x38] sm:$0xff] %vm509, %v949
      %966 = vst.msk [vmem:[%s145 + $0x40] sm:$0xff] %vm509, %v950
      %967 = vst.msk [vmem:[%s145 + $0x48] sm:$0xff] %vm509, %v951
      %968 = vst.msk [vmem:[%s145 + $0x50] sm:$0xff] %vm509, %v952
      %969 = vst.msk [vmem:[%s145 + $0x58] sm:$0xff] %vm509, %v953
      %970 = vst.msk [vmem:[%s145 + $0x60] sm:$0xff] %vm509, %v954
      %971 = vst.msk [vmem:[%s145 + $0x68] sm:$0xff] %vm509, %v955
      %972 = vst.msk [vmem:[%s145 + $0x70] sm:$0xff] %vm509, %v956
      %973 = vst.msk [vmem:[%s145 + $0x78] sm:$0xff] %vm509, %v957
      %s974 = smul.u32 16, %s13
      %p975 = scmp.lt.s32.totalorder %s974, 31
      %s976 = scalar_select %p975, %s974, 31
      %s977 = smul.addr %s976, 8
      %s978 = scalar_lea.vmem %s2, %s977
      // Predicated region
      $region29: #{tpu_custom_call.1} parent=27 // pred_check
        %p979 = pneg %p78
      $region30: #{tpu_custom_call.1} parent=27 // pred_check_branch
        %981 = sbr.rel (%p979) target = $region32
      $region31: #{tpu_custom_call.1} parent=27 // pred_region
        %s982 = smul.u32 16, %s13
      $region32: #{tpu_custom_call.1} parent=27 // pred_fallthru
        _
    $region28: #{tpu_custom_call.1} parent=5 // pred_fallthru
      _
    %p983 = scmp.le.s32.totalorder 2, %s8
    // Predicated region
    $region33: #{tpu_custom_call.1} parent=5 // pred_check
      %p984 = pneg %p983
    $region34: #{tpu_custom_call.1} parent=5 // pred_check_branch
      %986 = sbr.rel (%p984) target = $region36
    $region35: #{tpu_custom_call.1} parent=5 // pred_region
      %s987 = ssub.s32 %s8, 2
      // Predicated region
      $region37: #{tpu_custom_call.1} parent=35 // pred_check
        %p988 = pneg %p84
      $region38: #{tpu_custom_call.1} parent=35 // pred_check_branch
        %990 = sbr.rel (%p988) target = $region40
      $region39: #{tpu_custom_call.1} parent=35 // pred_region
        %s991 = smul.u32 16, %s14
        %p992 = scmp.lt.s32.totalorder %s991, 31
        %s993 = scalar_select %p992, %s991, 31
        %s994 = smul.addr %s993, 8
        %s995 = scalar_lea.vmem %s2, %s994
      $region40: #{tpu_custom_call.1} parent=35 // pred_fallthru
        _
    $region36: #{tpu_custom_call.1} parent=5 // pred_fallthru
      _
  $region6: #{tpu_custom_call.1} parent=0 // loop_footer
    %s12 = sadd.s32 1, %s8
  $region7: #{tpu_custom_call.1} parent=0 // loop_footer_branch
    %7 = sbr.rel target = $region3
  $region8: #{tpu_custom_call.1} parent=0 // loop_exit
    _

</llo_original>
